<compile_context>
chip_gen: v5e
topology: v5e:2x2
jax: 0.10.0
libtpu: 0.0.40
codegen_flags: <defaults>
</compile_context>

<pallas_src>
import jax
import jax.numpy as jnp
from jax.experimental import pallas as pl
from jax.experimental.pallas import tpu as pltpu

LN_EPS = 1e-12  # bert_config.layer_norm_eps


def _mrc_head_kernel(seq_ref, w_ref, b_ref, midw_ref, midb_ref,
                     sewt_ref, sebt_ref, out_ref):
    # seq_ref : (tb, ts, H)  activations (f32 or bf16)
    # w_ref   : (tb, 1, H)   f32 precomputed CLN scale
    # b_ref   : (tb, 1, H)   f32 precomputed CLN bias
    # midw_ref: (H, M) bf16 ; midb_ref: (1, M) f32
    # sewt_ref: (4, M) bf16 ; sebt_ref: (4, 1) f32
    # out_ref : (tb, 4, ts)  f32   <- lane-dense: sequence on the lane axis
    tb, ts, H = seq_ref.shape
    M = midw_ref.shape[1]

    # Conditional LayerNorm (population variance, eps inside the sqrt); LN
    # statistics in f32 even if the activation stream is bf16.
    x = seq_ref[...].astype(jnp.float32)
    mean = jnp.mean(x, axis=-1, keepdims=True)
    xc = x - mean
    var = jnp.mean(xc * xc, axis=-1, keepdims=True)
    xn = xc * jax.lax.rsqrt(var + LN_EPS)          # rsqrt -> EUP slot
    xn = xn * w_ref[...] + b_ref[...]              # (tb, ts, H)

    # mid_linear: one long 2D matmul on bf16 operands, f32 accumulation.
    xn_bf = xn.reshape(tb * ts, H).astype(jnp.bfloat16)
    mid = jnp.dot(xn_bf, midw_ref[...], preferred_element_type=jnp.float32)
    mid = jnp.maximum(mid + midb_ref[...], 0.0)    # (tb*ts, M) f32, ReLU
    mid = mid.reshape(tb, ts, M)

    # Fused start/end head, lane-dense orientation: (4, M) @ (M, ts) -> (4, ts).
    for bi in range(tb):                           # tb is small & static
        logits = jnp.dot(sewt_ref[...], mid[bi].T.astype(jnp.bfloat16),
                         preferred_element_type=jnp.float32) + sebt_ref[...]
        out_ref[bi] = logits.astype(out_ref.dtype)


def _vmem_capacity_bytes():
    try:
        return int(pltpu.get_tpu_info().vmem_capacity_bytes)
    except Exception:
        return 64 << 20   # conservative fallback (v7x-class)


def _choose_tiles(B, S, H, M, itemsize, budget_bytes, *, max_ts=512):
    """Pick (batch_tile, seq_tile) from a VMEM budget.

    Prefers >=4 total grid steps (>=2 per v7x TensorCore) when the problem is
    large enough, then the largest tiles that fit the budget.
    """
    def per_step(tb, ts):
        act_in = 2 * tb * ts * H * itemsize                 # double-buffered input
        cln = 2 * 2 * tb * H * 4                            # CLN scale+bias (x2 buf)
        out = 2 * tb * 8 * max(ts, 128) * 4                 # (tb,4,ts) padded to (8,>=128)
        interm = tb * ts * (2 * H * 4 + H * 2 + 6 * M)      # x/xn f32, xn bf16, mid f32+bf16
        return act_in + cln + out + interm

    weights = 2 * (H * M * 2 + M * 4 + 4 * M * 2 + 4 * 4)   # double-buffered const blocks
    avail = max(budget_bytes - weights, 1 << 20)

    # Sequence tile must keep the output block lane-dense: ts % 128 == 0 or ts == S.
    ts_cands = [d for d in range(S, 0, -1) if S % d == 0 and (d % 128 == 0 or d == S)]
    ts = next((d for d in ts_cands if d <= max_ts and per_step(1, d) <= avail),
              ts_cands[-1])

    tb_cands = [d for d in range(B, 0, -1) if B % d == 0]
    fitting = [d for d in tb_cands if per_step(d, ts) <= avail] or [1]
    total_steps = lambda tb: (B // tb) * (S // ts)
    for min_steps in (4, 2, 1):
        ok = [d for d in fitting if total_steps(d) >= min_steps]
        if ok:
            return ok[0], ts   # largest batch tile meeting the step requirement
    return 1, ts


def mrc_heads_pallas(seq_out, predicate_feature, params, *, block_b=None, block_s=None):
    """seq_out: (B,S,H) f32/bf16; predicate_feature: (B,E) -> (start, end) (B,S,2) f32."""
    B, S, H = seq_out.shape
    M = params["mid_w"].shape[1]
    itemsize = seq_out.dtype.itemsize

    # Hoist conditional-LN scale/bias out of the kernel (tiny f32 tensors).
    pf = predicate_feature.astype(jnp.float32)
    w_full = (pf @ params["cln_wdense"] + params["cln_w"]).reshape(B, 1, H)
    b_full = (pf @ params["cln_bdense"] + params["cln_b"]).reshape(B, 1, H)

    # Fuse start/end heads into one projection, transposed for lane-dense output.
    se_wt = jnp.concatenate([params["start_w"], params["end_w"]], axis=1).T   # (4, M)
    se_bt = jnp.concatenate([params["start_b"], params["end_b"]], axis=1).T   # (4, 1)

    # bf16 MXU operands for the weight matrices (f32 accumulation in-kernel).
    mid_w_bf = params["mid_w"].astype(jnp.bfloat16)
    se_wt_bf = se_wt.astype(jnp.bfloat16)
    mid_b = params["mid_b"].astype(jnp.float32)
    se_bt = se_bt.astype(jnp.float32)

    # Generation-gated VMEM policy (64 MiB parts vs 128 MiB parts).
    cap = _vmem_capacity_bytes()
    if cap <= (96 << 20):
        tile_budget, vmem_limit = 22 << 20, 46 << 20    # v7x-class
    else:
        tile_budget, vmem_limit = 80 << 20, 100 << 20   # v5e / v6e

    tb, ts = _choose_tiles(B, S, H, M, itemsize, tile_budget)
    if block_b is not None:
        tb = block_b
    if block_s is not None:
        ts = block_s
    assert B % tb == 0 and S % ts == 0, "tiles must divide (B, S)"

    grid = (B // tb, S // ts)
    in_specs = [
        pl.BlockSpec((tb, ts, H), lambda i, j: (i, j, 0)),   # activation tile
        pl.BlockSpec((tb, 1, H), lambda i, j: (i, 0, 0)),    # precomputed CLN scale
        pl.BlockSpec((tb, 1, H), lambda i, j: (i, 0, 0)),    # precomputed CLN bias
        pl.BlockSpec((H, M), lambda i, j: (0, 0)),           # mid_w (bf16)
        pl.BlockSpec((1, M), lambda i, j: (0, 0)),           # mid_b
        pl.BlockSpec((4, M), lambda i, j: (0, 0)),           # fused head weight^T (bf16)
        pl.BlockSpec((4, 1), lambda i, j: (0, 0)),           # fused head bias^T
    ]
    out_specs = pl.BlockSpec((tb, 4, ts), lambda i, j: (i, 0, j))
    out_shape = jax.ShapeDtypeStruct((B, 4, S), jnp.float32)

    # Scheduler hint for XLA around the custom call.
    bytes_accessed = (B * S * H * itemsize          # activations in
                      + 2 * B * H * 4               # CLN scale/bias
                      + H * M * 2 + M * 4           # mid_linear weights (bf16 w)
                      + 4 * M * 2 + 4 * 4           # fused head weights
                      + B * 4 * S * 4)              # logits out
    cost = pl.CostEstimate(
        flops=2 * B * S * (H * M + 4 * M) + 8 * B * S * H,
        transcendentals=B * S,
        bytes_accessed=bytes_accessed,
    )

    logits = pl.pallas_call(
        _mrc_head_kernel,
        out_shape=out_shape,
        grid_spec=pltpu.PrefetchScalarGridSpec(
            num_scalar_prefetch=0,
            grid=grid,
            in_specs=in_specs,
            out_specs=out_specs),
        compiler_params=pltpu.CompilerParams(
            dimension_semantics=("parallel", "parallel"),
            vmem_limit_bytes=int(vmem_limit)),
        cost_estimate=cost,
    )(seq_out, w_full, b_full, mid_w_bf, mid_b, se_wt_bf, se_bt)

    start_logits = jnp.transpose(logits[:, 0:2, :], (0, 2, 1))   # (B, S, 2)
    end_logits = jnp.transpose(logits[:, 2:4, :], (0, 2, 1))     # (B, S, 2)
    return start_logits, end_logits


def reference_heads(seq_out, cond, p):
    """Pure-JAX reference mirroring MRCModel forward (eval, use_type_embed=True)."""
    w = cond[:, None, :] @ p["cln_wdense"] + p["cln_w"][None]   # (B,1,H)
    b = cond[:, None, :] @ p["cln_bdense"] + p["cln_b"][None]
    mean = seq_out.mean(-1, keepdims=True)
    xc = seq_out - mean
    var = (xc * xc).mean(-1, keepdims=True)
    xn = xc / jnp.sqrt(var + LN_EPS)
    xn = xn * w + b
    mid = jnp.maximum(xn @ p["mid_w"] + p["mid_b"][None], 0.0)
    start = mid @ p["start_w"] + p["start_b"][None]
    end = mid @ p["end_w"] + p["end_b"][None]
    return start, end


if __name__ == "__main__":
    B, S, H, E, M = 2, 8, 32, 32, 128   # batch, seq, hidden, predicate-embed, mid_linear_dims
    vocab = 50
    key = jax.random.PRNGKey(0)
    ks = jax.random.split(key, 10)

    # Inputs matching MRCModel.forward signature
    token_ids = jax.random.randint(ks[0], (B, S), 0, vocab)
    token_type_ids = jax.random.randint(ks[1], (B, S), 0, 2)
    attention_masks = jnp.ones((B, S), jnp.int32)
    ent_type = jax.random.randint(ks[2], (B,), 0, 13)

    # TODO(synk): the pretrained BertModel encoder stack has no clean in-script
    # Pallas equivalent; stand-in seq_out = sum of word/position/token-type
    # embeddings.  The downstream head (CLN + mid_linear + start/end fc) is the
    # Pallas kernel.
    word_emb = 0.02 * jax.random.normal(ks[3], (vocab, H), jnp.float32)
    pos_emb = 0.02 * jax.random.normal(ks[4], (S, H), jnp.float32)
    ttype_emb = 0.02 * jax.random.normal(ks[5], (2, H), jnp.float32)
    type_emb_table = 0.02 * jax.random.normal(ks[6], (13, E), jnp.float32)  # nn.Embedding(13, E)

    seq_out = (word_emb[token_ids] + pos_emb[None, :, :]
               + ttype_emb[token_type_ids]).astype(jnp.float32)
    predicate_feature = type_emb_table[ent_type].astype(jnp.float32)        # self.type_embedding(ent_type)

    # Parameters, deterministic init per the module's __init__ / _init_weights:
    #   CLN: weight=ones, bias=zeros, weight_dense/bias_dense = zeros
    #   Linear layers: random weight, zero bias
    params = dict(
        cln_w=jnp.ones((1, H), jnp.float32),
        cln_b=jnp.zeros((1, H), jnp.float32),
        cln_wdense=jnp.zeros((E, H), jnp.float32),
        cln_bdense=jnp.zeros((E, H), jnp.float32),
        mid_w=0.05 * jax.random.normal(ks[7], (H, M), jnp.float32),
        mid_b=jnp.zeros((1, M), jnp.float32),
        start_w=0.05 * jax.random.normal(ks[8], (M, 2), jnp.float32),
        start_b=jnp.zeros((1, 2), jnp.float32),
        end_w=0.05 * jax.random.normal(ks[9], (M, 2), jnp.float32),
        end_b=jnp.zeros((1, 2), jnp.float32),
    )

    # --- f32 activation stream (bf16 MXU operands in-kernel) ----------------
    start_logits, end_logits = mrc_heads_pallas(seq_out, predicate_feature, params)
    jax.block_until_ready((start_logits, end_logits))

    start_ref, end_ref = reference_heads(seq_out, predicate_feature, params)
    assert start_logits.shape == (B, S, 2) and end_logits.shape == (B, S, 2)
    assert jnp.allclose(start_logits, start_ref, atol=2e-2, rtol=2e-2)
    assert jnp.allclose(end_logits, end_ref, atol=2e-2, rtol=2e-2)

    # --- bf16 activation stream (HBM-bandwidth optimization path) -----------
    start_bf16, end_bf16 = mrc_heads_pallas(
        seq_out.astype(jnp.bfloat16), predicate_feature, params)
    jax.block_until_ready((start_bf16, end_bf16))
    assert jnp.allclose(start_bf16, start_ref, atol=5e-2, rtol=5e-2)
    assert jnp.allclose(end_bf16, end_ref, atol=5e-2, rtol=5e-2)

    print("KERNEL_OK")
</pallas_src>

<mosaic_0001>
module attributes {stable_mosaic.version = 11 : i64} {
  func.func @_mrc_head_kernel(%arg0: i32, %arg1: i32, %arg2: memref<1x8x32xf32, #tpu.memory_space<vmem>>, %arg3: memref<1x1x32xf32, #tpu.memory_space<vmem>>, %arg4: memref<1x1x32xf32, #tpu.memory_space<vmem>>, %arg5: memref<32x128xbf16, #tpu.memory_space<vmem>>, %arg6: memref<1x128xf32, #tpu.memory_space<vmem>>, %arg7: memref<4x128xbf16, #tpu.memory_space<vmem>>, %arg8: memref<4x1xf32, #tpu.memory_space<vmem>>, %arg9: memref<1x4x8xf32, #tpu.memory_space<vmem>>) attributes {dimension_semantics = [#tpu.dimension_semantics<parallel>, #tpu.dimension_semantics<parallel>], iteration_bounds = array<i64: 2, 1>, scalar_prefetch = 0 : i64, scratch_operands = 0 : i64, tpu.core_type = #tpu.core_type<tc>, window_params = [{transform_indices = @transform_0, window_bounds = array<i64: 1, 8, 32>}, {transform_indices = @transform_1, window_bounds = array<i64: 1, 1, 32>}, {transform_indices = @transform_2, window_bounds = array<i64: 1, 1, 32>}, {pipeline_mode = #tpu.pipeline_mode<synchronous>, transform_indices = @transform_3, window_bounds = array<i64: 32, 128>}, {pipeline_mode = #tpu.pipeline_mode<synchronous>, transform_indices = @transform_4, window_bounds = array<i64: 1, 128>}, {pipeline_mode = #tpu.pipeline_mode<synchronous>, transform_indices = @transform_5, window_bounds = array<i64: 4, 128>}, {pipeline_mode = #tpu.pipeline_mode<synchronous>, transform_indices = @transform_6, window_bounds = array<i64: 4, 1>}, {transform_indices = @transform_7, window_bounds = array<i64: 1, 4, 8>}]} {
    %c0 = arith.constant 0 : index
    %c0_0 = arith.constant 0 : index
    %c0_1 = arith.constant 0 : index
    %0 = vector.load %arg2[%c0, %c0_0, %c0_1] : memref<1x8x32xf32, #tpu.memory_space<vmem>>, vector<1x8x32xf32>
    %cst = arith.constant dense<0.000000e+00> : vector<1x8xf32>
    %1 = vector.multi_reduction <add>, %0, %cst [2] : vector<1x8x32xf32> to vector<1x8xf32>
    %2 = vector.shape_cast %1 : vector<1x8xf32> to vector<1x8x1xf32>
    %cst_2 = arith.constant 3.200000e+01 : f32
    %3 = vector.broadcast %cst_2 : f32 to vector<1x8x1xf32>
    %4 = arith.divf %2, %3 : vector<1x8x1xf32>
    %5 = vector.broadcast %4 : vector<1x8x1xf32> to vector<1x8x32xf32>
    %6 = arith.subf %0, %5 : vector<1x8x32xf32>
    %7 = arith.mulf %6, %6 : vector<1x8x32xf32>
    %cst_3 = arith.constant dense<0.000000e+00> : vector<1x8xf32>
    %8 = vector.multi_reduction <add>, %7, %cst_3 [2] : vector<1x8x32xf32> to vector<1x8xf32>
    %9 = vector.shape_cast %8 : vector<1x8xf32> to vector<1x8x1xf32>
    %cst_4 = arith.constant 3.200000e+01 : f32
    %10 = vector.broadcast %cst_4 : f32 to vector<1x8x1xf32>
    %11 = arith.divf %9, %10 : vector<1x8x1xf32>
    %cst_5 = arith.constant 9.99999996E-13 : f32
    %12 = vector.broadcast %cst_5 : f32 to vector<1x8x1xf32>
    %13 = arith.addf %11, %12 : vector<1x8x1xf32>
    %14 = math.rsqrt %13 : vector<1x8x1xf32>
    %15 = vector.broadcast %14 : vector<1x8x1xf32> to vector<1x8x32xf32>
    %16 = arith.mulf %6, %15 : vector<1x8x32xf32>
    %c0_6 = arith.constant 0 : index
    %c0_7 = arith.constant 0 : index
    %c0_8 = arith.constant 0 : index
    %17 = vector.load %arg3[%c0_6, %c0_7, %c0_8] : memref<1x1x32xf32, #tpu.memory_space<vmem>>, vector<1x1x32xf32>
    %18 = vector.broadcast %17 : vector<1x1x32xf32> to vector<1x8x32xf32>
    %19 = arith.mulf %16, %18 : vector<1x8x32xf32>
    %c0_9 = arith.constant 0 : index
    %c0_10 = arith.constant 0 : index
    %c0_11 = arith.constant 0 : index
    %20 = vector.load %arg4[%c0_9, %c0_10, %c0_11] : memref<1x1x32xf32, #tpu.memory_space<vmem>>, vector<1x1x32xf32>
    %21 = vector.broadcast %20 : vector<1x1x32xf32> to vector<1x8x32xf32>
    %22 = arith.addf %19, %21 : vector<1x8x32xf32>
    %23 = vector.shape_cast %22 : vector<1x8x32xf32> to vector<8x32xf32>
    %24 = arith.truncf %23 : vector<8x32xf32> to vector<8x32xbf16>
    %c0_12 = arith.constant 0 : index
    %c0_13 = arith.constant 0 : index
    %25 = vector.load %arg5[%c0_12, %c0_13] : memref<32x128xbf16, #tpu.memory_space<vmem>>, vector<32x128xbf16>
    %cst_14 = arith.constant dense<0.000000e+00> : vector<8x128xf32>
    %26 = tpu.matmul %24, %25, %cst_14 {dimension_numbers = #tpu.dot_dimension_numbers<[1], [0], [0], [1], [0, 0, 1, 1], [], []>} : vector<8x32xbf16>, vector<32x128xbf16>, vector<8x128xf32> -> vector<8x128xf32>
    %c0_15 = arith.constant 0 : index
    %c0_16 = arith.constant 0 : index
    %27 = vector.load %arg6[%c0_15, %c0_16] : memref<1x128xf32, #tpu.memory_space<vmem>>, vector<1x128xf32>
    %28 = vector.broadcast %27 : vector<1x128xf32> to vector<8x128xf32>
    %29 = arith.addf %26, %28 : vector<8x128xf32>
    %cst_17 = arith.constant 0.000000e+00 : f32
    %30 = vector.broadcast %cst_17 : f32 to vector<8x128xf32>
    %31 = arith.maximumf %29, %30 : vector<8x128xf32>
    %32 = vector.shape_cast %31 : vector<8x128xf32> to vector<1x8x128xf32>
    %c0_18 = arith.constant 0 : index
    %c0_19 = arith.constant 0 : index
    %33 = vector.load %arg7[%c0_18, %c0_19] : memref<4x128xbf16, #tpu.memory_space<vmem>>, vector<4x128xbf16>
    %34 = vector.shape_cast %32 : vector<1x8x128xf32> to vector<8x128xf32>
    %35 = tpu.transpose %34, [1, 0] : vector<8x128xf32> -> vector<128x8xf32>
    %36 = arith.truncf %35 : vector<128x8xf32> to vector<128x8xbf16>
    %cst_20 = arith.constant dense<0.000000e+00> : vector<4x8xf32>
    %37 = tpu.matmul %33, %36, %cst_20 {dimension_numbers = #tpu.dot_dimension_numbers<[1], [0], [0], [1], [0, 0, 1, 1], [], []>} : vector<4x128xbf16>, vector<128x8xbf16>, vector<4x8xf32> -> vector<4x8xf32>
    %c0_21 = arith.constant 0 : index
    %c0_22 = arith.constant 0 : index
    %38 = vector.load %arg8[%c0_21, %c0_22] : memref<4x1xf32, #tpu.memory_space<vmem>>, vector<4x1xf32>
    %39 = vector.broadcast %38 : vector<4x1xf32> to vector<4x8xf32>
    %40 = arith.addf %37, %39 : vector<4x8xf32>
    %c0_23 = arith.constant 0 : index
    %c0_24 = arith.constant 0 : index
    %c0_25 = arith.constant 0 : index
    %41 = vector.load %arg9[%c0_23, %c0_24, %c0_25] : memref<1x4x8xf32, #tpu.memory_space<vmem>>, vector<1x4x8xf32>
    %42 = vector.shape_cast %41 : vector<1x4x8xf32> to vector<4x8xf32>
    %43 = vector.shape_cast %40 : vector<4x8xf32> to vector<1x4x8xf32>
    tpu.vector_store %arg9[%c0_23, %c0_24, %c0_25], %43 {strides = array<i32>} : memref<1x4x8xf32, #tpu.memory_space<vmem>>, vector<1x4x8xf32>,
    return
  }
  func.func @transform_0(%arg0: i32, %arg1: i32) -> (i32, i32, i32) {
    %c0_i32 = arith.constant 0 : i32
    %c0_i32_0 = arith.constant 0 : i32
    return %arg0, %arg1, %c0_i32 : i32, i32, i32
  }
  func.func @transform_1(%arg0: i32, %arg1: i32) -> (i32, i32, i32) {
    %c0_i32 = arith.constant 0 : i32
    %c0_i32_0 = arith.constant 0 : i32
    %c0_i32_1 = arith.constant 0 : i32
    return %arg0, %c0_i32, %c0_i32_0 : i32, i32, i32
  }
  func.func @transform_2(%arg0: i32, %arg1: i32) -> (i32, i32, i32) {
    %c0_i32 = arith.constant 0 : i32
    %c0_i32_0 = arith.constant 0 : i32
    %c0_i32_1 = arith.constant 0 : i32
    return %arg0, %c0_i32, %c0_i32_0 : i32, i32, i32
  }
  func.func @transform_3(%arg0: i32, %arg1: i32) -> (i32, i32) {
    %c0_i32 = arith.constant 0 : i32
    %c0_i32_0 = arith.constant 0 : i32
    %c0_i32_1 = arith.constant 0 : i32
    return %c0_i32, %c0_i32_0 : i32, i32
  }
  func.func @transform_4(%arg0: i32, %arg1: i32) -> (i32, i32) {
    %c0_i32 = arith.constant 0 : i32
    %c0_i32_0 = arith.constant 0 : i32
    %c0_i32_1 = arith.constant 0 : i32
    return %c0_i32, %c0_i32_0 : i32, i32
  }
  func.func @transform_5(%arg0: i32, %arg1: i32) -> (i32, i32) {
    %c0_i32 = arith.constant 0 : i32
    %c0_i32_0 = arith.constant 0 : i32
    %c0_i32_1 = arith.constant 0 : i32
    return %c0_i32, %c0_i32_0 : i32, i32
  }
  func.func @transform_6(%arg0: i32, %arg1: i32) -> (i32, i32) {
    %c0_i32 = arith.constant 0 : i32
    %c0_i32_0 = arith.constant 0 : i32
    %c0_i32_1 = arith.constant 0 : i32
    return %c0_i32, %c0_i32_0 : i32, i32
  }
  func.func @transform_7(%arg0: i32, %arg1: i32) -> (i32, i32, i32) {
    %c0_i32 = arith.constant 0 : i32
    %c0_i32_0 = arith.constant 0 : i32
    return %arg0, %c0_i32, %arg1 : i32, i32, i32
  }
}

</mosaic_0001>

<llo_original>
// kernel: tpu_custom_call.1
$region0: #{tpu_custom_call.1}
  #allocation0 [shape = 'u32[]', space=smem, size = 0x4, offset = 0x4, fixed_abs, tag = 'smem constant byte address 0x4 - core index']
  #allocation1 [shape = 'u32[72,128]{1,0:T(1,128)}', space=vmem, size = 0x9000, scoped, tag = 'internal scratch']
  %s0 = inlined_call_operand.hbm [shape: f32[2,8,32], index: 0, kind: input, shape index: {}]
  %s1 = inlined_call_operand.vmem [shape: f32[2,1,32], index: 1, kind: input, shape index: {}]
  %s2 = inlined_call_operand.vmem [shape: f32[2,1,32], index: 2, kind: input, shape index: {}]
  %s3 = inlined_call_operand.hbm [shape: bf16[32,128], index: 3, kind: input, shape index: {}]
  %s4 = inlined_call_operand.vmem [shape: f32[1,128], index: 4, kind: input, shape index: {}]
  %s5 = inlined_call_operand.vmem [shape: bf16[4,128], index: 5, kind: input, shape index: {}]
  %s6 = inlined_call_operand.vmem [shape: f32[4,1], index: 6, kind: input, shape index: {}]
  %s7 = inlined_call_operand.hbm [shape: f32[2,4,8], index: 7, kind: output, shape index: {}]
  %s8 = sld [smem:[#allocation0]]
  $region69: #{tpu_custom_call.1} parent=0
    _
  %s10 = ssub.s32 1, %s8
  %s11 = scalar_select 0, %s10, %s8
  $region1: #{tpu_custom_call.1} parent=0
    #allocation2 [shape = 'u8[8192]{0}', space=vmem, size = 0x2000, scoped, tag = 'input window, operand 0']
    #allocation3 [shape = 's32[2]{0}', space=sflag, size = 0x8, scoped, tag = 'scoped memory for tpu_custom_call.1']
    #allocation4 [shape = 's32[2]{0}', space=sflag, size = 0x8, scoped, tag = 'scoped memory for tpu_custom_call.1']
    #allocation5 [shape = 'u8[8192]{0}', space=vmem, size = 0x2000, scoped, tag = 'input window, operand 3, single buffered']
    #allocation6 [shape = 's32[1]{0}', space=sflag, size = 0x4, scoped, tag = 'scoped memory for tpu_custom_call.1']
    #allocation7 [shape = 'u8[4096]{0}', space=vmem, size = 0x1000, scoped, tag = 'output window, operand 0']
    %12 = vsyncpa [#allocation3], 0
    %s13 = scalar_lea.sflag [#allocation3], 1
    %14 = vsyncpa %s13, 0
    %15 = vsyncpa [#allocation6], 0
    %16 = vsyncpa [#allocation4], 0
    %s17 = scalar_lea.sflag [#allocation4], 1
    %18 = vsyncpa %s17, 0
    loop: start=0, step=1, limit=4
    $region2: #{tpu_custom_call.1} parent=1 // loop_pre_header
      _
    $region3: #{tpu_custom_call.1} parent=1 // loop_header
      %s20 = sphi 0, %s24
      %p21 = scmp.ge.s32.totalorder %s20, 4
      %s27 = sphi 0, %s39
      %s28 = sphi 0, %s35
      %s29 = sphi 0, %s27
      %s30 = sphi 0, %s28
      %s31 = sphi 0, %s29
      %s32 = sphi 0, %s30
      %s44 = sphi 0, %s46
      %s47 = sphi 0, %s44
      %s48 = sphi 0, %s47
      %s64 = sphi 0, %s48
      %s70 = sphi 0, %s72
      %s73 = sphi 0, %s70
      %s74 = sphi 0, %s73
      %s90 = sphi 0, %s74
      %s96 = sphi 0, %s98
      %s99 = sphi 0, %s96
      %s100 = sphi 0, %s99
      %s116 = sphi 0, %s100
      %s120 = sphi 0, %s120
      %s122 = sphi 0, %s120
      %s123 = sphi 0, %s122
      %s137 = sphi 0, %s123
      %s141 = sphi 0, %s141
      %s143 = sphi 0, %s141
      %s144 = sphi 0, %s143
      %s158 = sphi 0, %s144
      %s162 = sphi 0, %s162
      %s164 = sphi 0, %s162
      %s165 = sphi 0, %s164
      %s179 = sphi 0, %s165
      %s183 = sphi 0, %s183
      %s185 = sphi 0, %s183
      %s186 = sphi 0, %s185
      %s200 = sphi 0, %s186
      %s208 = sphi 0, %s210
      %s211 = sphi 0, %s208
      %s212 = sphi 0, %s211
      %s228 = sphi 0, %s212
    $region4: #{tpu_custom_call.1} parent=1 // loop_header_branch
      %23 = sbr.rel (%p21) target = $region8
    $region5: #{tpu_custom_call.1} parent=1 // loop_body
      %s25 = ssub.s32 %s20, 1
      %s26 = ssub.s32 %s20, 2
      %s33 = sadd.s32 1, %s28
      %p34 = scmp.ge.s32.totalorder %s33, 1
      %s35 = scalar_select %p34, 0, %s33
      %s36 = sadd.s32 1, %s27
      %s37 = scalar_select %p34, %s36, %s27
      %p38 = scmp.ge.s32.totalorder %s37, 2
      %s39 = scalar_select %p38, 0, %s37
      %s40 = ssub.s32 %s27, %s39
      %s41 = ssub.s32 %s28, %s35
      %s42 = sor.u32 %s40, %s41
      %p43 = scmp.eq.s32.totalorder %s42, 0
      %s45 = sadd.s32 %s44, 1
      %s46 = scalar_select %p43, %s44, %s45
      %p49 = pneg %p43
      %p50 = scmp.eq.s32.totalorder %s20, 1
      %p51 = por %p49, %p50
      %p52 = scmp.ne.s32.totalorder %s44, %s47
      %p53 = scmp.eq.s32.totalorder %s20, 0
      %p54 = por %p52, %p53
      %p55 = scmp.ne.s32.totalorder %s44, %s47
      %p56 = scmp.eq.s32.totalorder %s25, 1
      %p57 = por %p55, %p56
      %p58 = scmp.ne.s32.totalorder %s47, %s48
      %p59 = scmp.eq.s32.totalorder %s25, 0
      %p60 = por %p58, %p59
      %p61 = scmp.ne.s32.totalorder %s47, %s48
      %p62 = scmp.eq.s32.totalorder %s26, 1
      %p63 = por %p61, %p62
      %p65 = scmp.ne.s32.totalorder %s48, %s64
      %p66 = scmp.eq.s32.totalorder %s26, 0
      %p67 = por %p65, %p66
      %s68 = ssub.s32 %s27, %s39
      %p69 = scmp.eq.s32.totalorder %s68, 0
      %s71 = sadd.s32 %s70, 1
      %s72 = scalar_select %p69, %s70, %s71
      %p75 = pneg %p69
      %p76 = scmp.eq.s32.totalorder %s20, 1
      %p77 = por %p75, %p76
      %p78 = scmp.ne.s32.totalorder %s70, %s73
      %p79 = scmp.eq.s32.totalorder %s20, 0
      %p80 = por %p78, %p79
      %p81 = scmp.ne.s32.totalorder %s70, %s73
      %p82 = scmp.eq.s32.totalorder %s25, 1
      %p83 = por %p81, %p82
      %p84 = scmp.ne.s32.totalorder %s73, %s74
      %p85 = scmp.eq.s32.totalorder %s25, 0
      %p86 = por %p84, %p85
      %p87 = scmp.ne.s32.totalorder %s73, %s74
      %p88 = scmp.eq.s32.totalorder %s26, 1
      %p89 = por %p87, %p88
      %p91 = scmp.ne.s32.totalorder %s74, %s90
      %p92 = scmp.eq.s32.totalorder %s26, 0
      %p93 = por %p91, %p92
      %s94 = ssub.s32 %s27, %s39
      %p95 = scmp.eq.s32.totalorder %s94, 0
      %s97 = sadd.s32 %s96, 1
      %s98 = scalar_select %p95, %s96, %s97
      %p101 = pneg %p95
      %p102 = scmp.eq.s32.totalorder %s20, 1
      %p103 = por %p101, %p102
      %p104 = scmp.ne.s32.totalorder %s96, %s99
      %p105 = scmp.eq.s32.totalorder %s20, 0
      %p106 = por %p104, %p105
      %p107 = scmp.ne.s32.totalorder %s96, %s99
      %p108 = scmp.eq.s32.totalorder %s25, 1
      %p109 = por %p107, %p108
      %p110 = scmp.ne.s32.totalorder %s99, %s100
      %p111 = scmp.eq.s32.totalorder %s25, 0
      %p112 = por %p110, %p111
      %p113 = scmp.ne.s32.totalorder %s99, %s100
      %p114 = scmp.eq.s32.totalorder %s26, 1
      %p115 = por %p113, %p114
      %p117 = scmp.ne.s32.totalorder %s100, %s116
      %p118 = scmp.eq.s32.totalorder %s26, 0
      %p119 = por %p117, %p118
      %s121 = sadd.s32 %s120, 1
      %p124 = scmp.eq.s32.totalorder %s20, 1
      %p125 = scmp.ne.s32.totalorder %s120, %s122
      %p126 = scmp.eq.s32.totalorder %s20, 0
      %p127 = por %p125, %p126
      %p128 = scmp.ne.s32.totalorder %s120, %s122
      %p129 = scmp.eq.s32.totalorder %s25, 1
      %p130 = por %p128, %p129
      %p131 = scmp.ne.s32.totalorder %s122, %s123
      %p132 = scmp.eq.s32.totalorder %s25, 0
      %p133 = por %p131, %p132
      %p134 = scmp.ne.s32.totalorder %s122, %s123
      %p135 = scmp.eq.s32.totalorder %s26, 1
      %p136 = por %p134, %p135
      %p138 = scmp.ne.s32.totalorder %s123, %s137
      %p139 = scmp.eq.s32.totalorder %s26, 0
      %p140 = por %p138, %p139
      %s142 = sadd.s32 %s141, 1
      %p145 = scmp.eq.s32.totalorder %s20, 1
      %p146 = scmp.ne.s32.totalorder %s141, %s143
      %p147 = scmp.eq.s32.totalorder %s20, 0
      %p148 = por %p146, %p147
      %p149 = scmp.ne.s32.totalorder %s141, %s143
      %p150 = scmp.eq.s32.totalorder %s25, 1
      %p151 = por %p149, %p150
      %p152 = scmp.ne.s32.totalorder %s143, %s144
      %p153 = scmp.eq.s32.totalorder %s25, 0
      %p154 = por %p152, %p153
      %p155 = scmp.ne.s32.totalorder %s143, %s144
      %p156 = scmp.eq.s32.totalorder %s26, 1
      %p157 = por %p155, %p156
      %p159 = scmp.ne.s32.totalorder %s144, %s158
      %p160 = scmp.eq.s32.totalorder %s26, 0
      %p161 = por %p159, %p160
      %s163 = sadd.s32 %s162, 1
      %p166 = scmp.eq.s32.totalorder %s20, 1
      %p167 = scmp.ne.s32.totalorder %s162, %s164
      %p168 = scmp.eq.s32.totalorder %s20, 0
      %p169 = por %p167, %p168
      %p170 = scmp.ne.s32.totalorder %s162, %s164
      %p171 = scmp.eq.s32.totalorder %s25, 1
      %p172 = por %p170, %p171
      %p173 = scmp.ne.s32.totalorder %s164, %s165
      %p174 = scmp.eq.s32.totalorder %s25, 0
      %p175 = por %p173, %p174
      %p176 = scmp.ne.s32.totalorder %s164, %s165
      %p177 = scmp.eq.s32.totalorder %s26, 1
      %p178 = por %p176, %p177
      %p180 = scmp.ne.s32.totalorder %s165, %s179
      %p181 = scmp.eq.s32.totalorder %s26, 0
      %p182 = por %p180, %p181
      %s184 = sadd.s32 %s183, 1
      %p187 = scmp.eq.s32.totalorder %s20, 1
      %p188 = scmp.ne.s32.totalorder %s183, %s185
      %p189 = scmp.eq.s32.totalorder %s20, 0
      %p190 = por %p188, %p189
      %p191 = scmp.ne.s32.totalorder %s183, %s185
      %p192 = scmp.eq.s32.totalorder %s25, 1
      %p193 = por %p191, %p192
      %p194 = scmp.ne.s32.totalorder %s185, %s186
      %p195 = scmp.eq.s32.totalorder %s25, 0
      %p196 = por %p194, %p195
      %p197 = scmp.ne.s32.totalorder %s185, %s186
      %p198 = scmp.eq.s32.totalorder %s26, 1
      %p199 = por %p197, %p198
      %p201 = scmp.ne.s32.totalorder %s186, %s200
      %p202 = scmp.eq.s32.totalorder %s26, 0
      %p203 = por %p201, %p202
      %s204 = ssub.s32 %s27, %s39
      %s205 = ssub.s32 %s28, %s35
      %s206 = sor.u32 %s204, %s205
      %p207 = scmp.eq.s32.totalorder %s206, 0
      %s209 = sadd.s32 %s208, 1
      %s210 = scalar_select %p207, %s208, %s209
      %p213 = pneg %p207
      %p214 = scmp.eq.s32.totalorder %s20, 1
      %p215 = por %p213, %p214
      %p216 = scmp.ne.s32.totalorder %s208, %s211
      %p217 = scmp.eq.s32.totalorder %s20, 0
      %p218 = por %p216, %p217
      %p219 = scmp.ne.s32.totalorder %s208, %s211
      %p220 = scmp.eq.s32.totalorder %s25, 1
      %p221 = por %p219, %p220
      %p222 = scmp.ne.s32.totalorder %s211, %s212
      %p223 = scmp.eq.s32.totalorder %s25, 0
      %p224 = por %p222, %p223
      %p225 = scmp.ne.s32.totalorder %s211, %s212
      %p226 = scmp.eq.s32.totalorder %s26, 1
      %p227 = por %p225, %p226
      %p229 = scmp.ne.s32.totalorder %s212, %s228
      %p230 = scmp.eq.s32.totalorder %s26, 0
      %p231 = por %p229, %p230
      %p232 = scmp.le.s32.totalorder 1, %s20
      %p233 = scmp.lt.s32.totalorder %s20, 3
      %p234 = pnand %p232, %p233
      %p235 = pneg %p234
      // Predicated region
      $region9: #{tpu_custom_call.1} parent=5 // pred_check
        _
      $region10: #{tpu_custom_call.1} parent=5 // pred_check_branch
        %237 = sbr.rel (%p234) target = $region12
      $region11: #{tpu_custom_call.1} parent=5 // pred_region
        %s238 = ssub.s32 %s20, 1
        // Predicated region
        $region13: #{tpu_custom_call.1} parent=11 // pred_check
          %p239 = pneg %p133
        $region14: #{tpu_custom_call.1} parent=11 // pred_check_branch
          %241 = sbr.rel (%p239) target = $region16
        $region15: #{tpu_custom_call.1} parent=11 // pred_region
          %243 = vsyncadd [#allocation6], 0
          %s244 = sshll.u32 %s3, 4
          %s245 = int_to_ptr.hbm [resolvable:$true] %s244
          %s246 = sshll.u32 [#allocation5], 4
          %s247 = int_to_ptr.vmem [resolvable:$true] %s246
          %252 = dma.hbm_to_vmem [thread:$0]  %s245, 256, %s247, [#allocation6], 64, 64, 4
        $region16: #{tpu_custom_call.1} parent=11 // pred_fallthru
          _
        // Predicated region
        $region17: #{tpu_custom_call.1} parent=11 // pred_check
          %p253 = pneg %p154
        $region18: #{tpu_custom_call.1} parent=11 // pred_check_branch
          %255 = sbr.rel (%p253) target = $region20
        $region19: #{tpu_custom_call.1} parent=11 // pred_region
          _
        $region20: #{tpu_custom_call.1} parent=11 // pred_fallthru
          _
        // Predicated region
        $region21: #{tpu_custom_call.1} parent=11 // pred_check
          %p256 = pneg %p175
        $region22: #{tpu_custom_call.1} parent=11 // pred_check_branch
          %258 = sbr.rel (%p256) target = $region24
        $region23: #{tpu_custom_call.1} parent=11 // pred_region
          _
        $region24: #{tpu_custom_call.1} parent=11 // pred_fallthru
          _
        // Predicated region
        $region25: #{tpu_custom_call.1} parent=11 // pred_check
          %p259 = pneg %p196
        $region26: #{tpu_custom_call.1} parent=11 // pred_check_branch
          %261 = sbr.rel (%p259) target = $region28
        $region27: #{tpu_custom_call.1} parent=11 // pred_region
          _
        $region28: #{tpu_custom_call.1} parent=11 // pred_fallthru
          _
      $region12: #{tpu_custom_call.1} parent=5 // pred_fallthru
        _
      %p262 = scmp.lt.s32.totalorder %s20, 2
      // Predicated region
      $region29: #{tpu_custom_call.1} parent=5 // pred_check
        %p263 = pneg %p262
      $region30: #{tpu_custom_call.1} parent=5 // pred_check_branch
        %265 = sbr.rel (%p263) target = $region32
      $region31: #{tpu_custom_call.1} parent=5 // pred_region
        // Predicated region
        $region33: #{tpu_custom_call.1} parent=31 // pred_check
          %p266 = pneg %p54
        $region34: #{tpu_custom_call.1} parent=31 // pred_check_branch
          %268 = sbr.rel (%p266) target = $region36
        $region35: #{tpu_custom_call.1} parent=31 // pred_region
          %s269 = sand.u32 %s44, 1
          %s270 = scalar_lea.sflag [#allocation3], %s269
          %s271 = sand.u32 %s44, 1
          %s272 = smul.addr %s271, 8
          %s273 = scalar_lea.vmem [#allocation2], %s272
          %275 = vsyncadd %s270, 0
          %s276 = sadd.s32 %s28, %s27
          %s277 = smul.addr %s276, 8
          %s278 = scalar_lea.hbm %s0, %s277
          %s280 = sshll.u32 %s278, 4
          %s281 = int_to_ptr.hbm [resolvable:$true] %s280
          %s282 = sshll.u32 %s273, 4
          %s283 = int_to_ptr.vmem [resolvable:$true] %s282
          %285 = dma.hbm_to_vmem [thread:$0]  %s281, 128, %s283, %s270
        $region36: #{tpu_custom_call.1} parent=31 // pred_fallthru
          _
        // Predicated region
        $region37: #{tpu_custom_call.1} parent=31 // pred_check
          %p286 = pneg %p80
        $region38: #{tpu_custom_call.1} parent=31 // pred_check_branch
          %288 = sbr.rel (%p286) target = $region40
        $region39: #{tpu_custom_call.1} parent=31 // pred_region
          %p289 = scmp.lt.s32.totalorder %s27, 1
          %s290 = scalar_select %p289, %s27, 1
          %s291 = scalar_lea.vmem %s1, %s290
        $region40: #{tpu_custom_call.1} parent=31 // pred_fallthru
          _
        // Predicated region
        $region41: #{tpu_custom_call.1} parent=31 // pred_check
          %p292 = pneg %p106
        $region42: #{tpu_custom_call.1} parent=31 // pred_check_branch
          %294 = sbr.rel (%p292) target = $region44
        $region43: #{tpu_custom_call.1} parent=31 // pred_region
          %p295 = scmp.lt.s32.totalorder %s27, 1
          %s296 = scalar_select %p295, %s27, 1
          %s297 = scalar_lea.vmem %s2, %s296
        $region44: #{tpu_custom_call.1} parent=31 // pred_fallthru
          _
      $region32: #{tpu_custom_call.1} parent=5 // pred_fallthru
        _
      %p298 = scmp.le.s32.totalorder 1, %s20
      %p299 = scmp.lt.s32.totalorder %s20, 3
      %p300 = pnand %p298, %p299
      %p301 = pneg %p300
      // Predicated region
      $region45: #{tpu_custom_call.1} parent=5 // pred_check
        _
      $region46: #{tpu_custom_call.1} parent=5 // pred_check_branch
        %303 = sbr.rel (%p300) target = $region48
      $region47: #{tpu_custom_call.1} parent=5 // pred_region
        %s304 = ssub.s32 %s20, 1
        %s305 = sand.u32 %s47, 1
        %s306 = scalar_lea.sflag [#allocation3], %s305
        %s307 = sand.u32 %s47, 1
        %s308 = smul.addr %s307, 8
        %s309 = scalar_lea.vmem [#allocation2], %s308
        // Predicated region
        $region49: #{tpu_custom_call.1} parent=47 // pred_check
          %p310 = pneg %p60
        $region50: #{tpu_custom_call.1} parent=47 // pred_check_branch
          %312 = sbr.rel (%p310) target = $region52
        $region51: #{tpu_custom_call.1} parent=47 // pred_region
          %314 = dma.done %s306, 128
        $region52: #{tpu_custom_call.1} parent=47 // pred_fallthru
          _
        // Predicated region
        $region53: #{tpu_custom_call.1} parent=47 // pred_check
          %p315 = pneg %p133
        $region54: #{tpu_custom_call.1} parent=47 // pred_check_branch
          %317 = sbr.rel (%p315) target = $region56
        $region55: #{tpu_custom_call.1} parent=47 // pred_region
          %319 = dma.done [#allocation6], 256
        $region56: #{tpu_custom_call.1} parent=47 // pred_fallthru
          _
        %s320 = sand.u32 %s47, 1
        %s321 = scalar_lea.sflag [#allocation3], %s320
        %s322 = sand.u32 %s47, 1
        %s323 = smul.addr %s322, 8
        %s324 = scalar_lea.vmem [#allocation2], %s323
        %p325 = pneg %p60
        %p326 = pneg %p57
        %p327 = scmp.lt.s32.totalorder %s29, 1
        %s328 = scalar_select %p327, %s29, 1
        %s329 = scalar_lea.vmem %s1, %s328
        %p330 = pneg %p86
        %p331 = pneg %p83
        %p332 = scmp.lt.s32.totalorder %s29, 1
        %s333 = scalar_select %p332, %s29, 1
        %s334 = scalar_lea.vmem %s2, %s333
        %p335 = pneg %p112
        %p336 = pneg %p109
        %p337 = pneg %p133
        %p338 = pneg %p130
        %p339 = pneg %p154
        %p340 = pneg %p151
        %p341 = pneg %p175
        %p342 = pneg %p172
        %p343 = pneg %p196
        %p344 = pneg %p193
        %p345 = pneg %p224
        %p346 = pneg %p221
        %s347 = sand.u32 %s211, 1
        %s348 = scalar_lea.sflag [#allocation4], %s347
        %s349 = sand.u32 %s211, 1
        %s350 = smul.addr %s349, 4
        %s351 = scalar_lea.vmem [#allocation7], %s350
        %p352 = scmp.lt.s32.totalorder %s29, 1
        %s353 = scalar_select %p352, %s29, 1
        %s354 = scalar_lea.vmem %s1, %s353
        %p355 = scmp.lt.s32.totalorder %s29, 1
        %s356 = scalar_select %p355, %s29, 1
        %s357 = scalar_lea.vmem %s2, %s356
        %v359 = vld [vmem:[%s309] sm:$0xff]
        %vm360 = vcmask 261120
        %v361 = vsel %vm360, %v359, 0.0
        %362 = vadd.xlane.f32.xlu0 %v361
        %v363 = vpop.xlane.xlu0 %362
        %v364 = vrcp.pop 32.0
        %v365 = vmul.f32 32.0, %v364
        %v366 = vsub.f32 1.0, %v365
        %v367 = vmul.f32 %v364, %v366
        %v368 = vadd.f32 %v364, %v367
        %vm369 = vweird.f32 %v364
        %v370 = vsel %vm369, %v364, %v368
        %v371 = vmul.f32 %v363, %v370
        %v372 = vsub.f32 %v359, %v371
        %v373 = vmul.f32 %v372, %v372
        %v374 = vsel %vm360, %v373, 0.0
        %375 = vadd.xlane.f32.xlu0 %v374
        %v376 = vpop.xlane.xlu0 %375
        %v377 = vmul.f32 %v376, %v370
        %v378 = vadd.f32 %v377, 1e-12
        %v379 = vrsqrt.pop %v378
        %v380 = vmul.f32 %v379, %v378
        %v381 = vmul.f32 %v380, %v379
        %v382 = vmul.f32 0.5, %v381
        %v383 = vsub.f32 1.5, %v382
        %v384 = vmul.f32 %v379, %v383
        %vm385 = vweird.f32 %v378
        %vm386 = vweird.f32 %v379
        %vm387 = vmor %vm385, %vm386
        %v388 = vsel %vm387, %v379, %v384
        %v389 = vmul.f32 %v372, %v388
        %v390 = vld [vmem:[%s354] sm:$0x1]
        %v392 = vperm.slane %v390, 0
        %v394 = vmul.f32 %v389, %v392
        %v395 = vld [vmem:[%s357] sm:$0x1]
        %v397 = vperm.slane %v395, 0
        %v399 = vadd.f32 %v394, %v397
        %v400 = vpack.c.bf16 %v399, %v399
        %v401 = vld [vmem:[#allocation5] sm:$0xf]
        %v402 = vld [vmem:[#allocation5 + $0x4] sm:$0xf]
        %v403 = vld [vmem:[#allocation5 + $0x8] sm:$0xf]
        %v404 = vld [vmem:[#allocation5 + $0xc] sm:$0xf]
        %v405 = vld [vmem:[%s4] sm:$0x1]
        %v407 = vperm.slane %v405, 0
        %v413 = vunpack.c.l.b16 %v401
        %v414 = vunpack.c.l.b16 %v402
        %v415 = vunpack.c.l.b16 %v403
        %v416 = vunpack.c.l.b16 %v404
        %v417 = vpack.c.b16 %v414, %v413
        %v418 = vpack.c.b16 %v416, %v415
        %v422 = vsel %vm360, %v400, 0
        %424 = vmatpush.bf16.msra.mxu0 0
        %425 = vmatpush.bf16.msra.mxu0 0
        %426 = vmatpush.bf16.msra.mxu0 0
        %427 = vmatpush.bf16.msra.mxu0 0
        %428 = vmatpush.bf16.msra.mxu0 0
        %429 = vmatpush.bf16.msra.mxu0 0
        %430 = vmatpush.bf16.msra.mxu0 %v418
        %431 = vmatpush.bf16.msra.mxu0 %v417
        %432 = vmatmul.bf16.gmra.mxu0 %v422
        %v433 = vpop.f32.mrf.mxu0
        %v434 = vadd.f32 %v407, %v433
        %v435 = vpop.f32.mrf.mxu0
        %436 = vdwg.mxu0
        %v437 = vmax.f32 %v434, 0.0
        %v438 = vld [vmem:[%s5] sm:$0x3]
        %439 = vxpose.xlu0.b32.start [1/16] %v437, 128
        %440 = vxpose.xlu0.b32.cont [2/16] 0.0, 128
        %441 = vxpose.xlu0.b32.cont [3/16] 0.0, 128
        %442 = vxpose.xlu0.b32.cont [4/16] 0.0, 128
        %443 = vxpose.xlu0.b32.cont [5/16] 0.0, 128
        %444 = vxpose.xlu0.b32.cont [6/16] 0.0, 128
        %445 = vxpose.xlu0.b32.cont [7/16] 0.0, 128
        %446 = vxpose.xlu0.b32.cont [8/16] 0.0, 128
        %447 = vxpose.xlu0.b32.cont [9/16] 0.0, 128
        %448 = vxpose.xlu0.b32.cont [10/16] 0.0, 128
        %449 = vxpose.xlu0.b32.cont [11/16] 0.0, 128
        %450 = vxpose.xlu0.b32.cont [12/16] 0.0, 128
        %451 = vxpose.xlu0.b32.cont [13/16] 0.0, 128
        %452 = vxpose.xlu0.b32.cont [14/16] 0.0, 128
        %453 = vxpose.xlu0.b32.cont [15/16] 0.0, 128
        %454 = vxpose.xlu0.b32.end [16/16] 0.0, 128
        %v455 = vpop.trf.xlu0
        %v456 = vpop.trf.xlu0
        %v457 = vpop.trf.xlu0
        %v458 = vpop.trf.xlu0
        %v459 = vpop.trf.xlu0
        %v460 = vpop.trf.xlu0
        %v461 = vpop.trf.xlu0
        %v462 = vpop.trf.xlu0
        %v463 = vpop.trf.xlu0
        %v464 = vpop.trf.xlu0
        %v465 = vpop.trf.xlu0
        %v466 = vpop.trf.xlu0
        %v467 = vpop.trf.xlu0
        %v468 = vpop.trf.xlu0
        %v469 = vpop.trf.xlu0
        %v470 = vpop.trf.xlu0
        %v471 = vpack.c.bf16 %v456, %v455
        %v472 = vpack.c.bf16 %v458, %v457
        %v473 = vpack.c.bf16 %v460, %v459
        %v474 = vpack.c.bf16 %v462, %v461
        %v475 = vpack.c.bf16 %v464, %v463
        %v476 = vpack.c.bf16 %v466, %v465
        %v477 = vpack.c.bf16 %v468, %v467
        %v478 = vpack.c.bf16 %v470, %v469
        %v479 = vld [vmem:[%s6] sm:$0xf]
        %481 = vset.pattern.permute.xlu0 0
        %482 = vperm.xlu0 %481, %v479
        %v483 = vpop.permute.xlu0 %482
        %485 = vmatpush.bf16.msra.mxu0 %v478
        %486 = vmatpush.bf16.msra.mxu0 %v477
        %487 = vmatpush.bf16.msra.mxu0 %v476
        %488 = vmatpush.bf16.msra.mxu0 %v475
        %489 = vmatpush.bf16.msra.mxu0 %v474
        %490 = vmatpush.bf16.msra.mxu0 %v473
        %491 = vmatpush.bf16.msra.mxu0 %v472
        %492 = vmatpush.bf16.msra.mxu0 %v471
        %493 = vmatmul.bf16.gmra.mxu0 %v438
        %v494 = vpop.f32.mrf.mxu0
        %v495 = vadd.f32 %v483, %v494
        %v496 = vpop.f32.mrf.mxu0
        %497 = vdwg.mxu0
        %vm498 = vcmask 60416
        %499 = vst.msk [vmem:[%s351] sm:$0xf] %vm498, %v495
        %s500 = sand.u32 %s211, 1
        %s501 = scalar_lea.sflag [#allocation4], %s500
        %s502 = sand.u32 %s211, 1
        %s503 = smul.addr %s502, 4
        %s504 = scalar_lea.vmem [#allocation7], %s503
        // Predicated region
        $region57: #{tpu_custom_call.1} parent=47 // pred_check
          %p505 = pneg %p221
        $region58: #{tpu_custom_call.1} parent=47 // pred_check_branch
          %507 = sbr.rel (%p505) target = $region60
        $region59: #{tpu_custom_call.1} parent=47 // pred_region
          %509 = vsyncadd %s501, 0
          %s510 = sadd.s32 %s30, %s29
          %s511 = smul.addr %s510, 4
          %s512 = scalar_lea.hbm %s7, %s511
          %s514 = sshll.u32 %s504, 4
          %s515 = int_to_ptr.vmem [resolvable:$true] %s514
          %s516 = sshll.u32 %s512, 4
          %s517 = int_to_ptr.hbm [resolvable:$true] %s516
          %519 = dma.vmem_to_hbm [thread:$0]  %s515, 64, %s517, %s501
        $region60: #{tpu_custom_call.1} parent=47 // pred_fallthru
          _
      $region48: #{tpu_custom_call.1} parent=5 // pred_fallthru
        _
      %p520 = scmp.le.s32.totalorder 2, %s20
      // Predicated region
      $region61: #{tpu_custom_call.1} parent=5 // pred_check
        %p521 = pneg %p520
      $region62: #{tpu_custom_call.1} parent=5 // pred_check_branch
        %523 = sbr.rel (%p521) target = $region64
      $region63: #{tpu_custom_call.1} parent=5 // pred_region
        %s524 = ssub.s32 %s20, 2
        // Predicated region
        $region65: #{tpu_custom_call.1} parent=63 // pred_check
          %p525 = pneg %p227
        $region66: #{tpu_custom_call.1} parent=63 // pred_check_branch
          %527 = sbr.rel (%p525) target = $region68
        $region67: #{tpu_custom_call.1} parent=63 // pred_region
          %s528 = sand.u32 %s212, 1
          %s529 = scalar_lea.sflag [#allocation4], %s528
          %s530 = sand.u32 %s212, 1
          %s531 = smul.addr %s530, 4
          %s532 = scalar_lea.vmem [#allocation7], %s531
          %534 = dma.done %s529, 64
        $region68: #{tpu_custom_call.1} parent=63 // pred_fallthru
          _
      $region64: #{tpu_custom_call.1} parent=5 // pred_fallthru
        _
    $region6: #{tpu_custom_call.1} parent=1 // loop_footer
      %s24 = sadd.s32 1, %s20
    $region7: #{tpu_custom_call.1} parent=1 // loop_footer_branch
      %19 = sbr.rel target = $region3
    $region8: #{tpu_custom_call.1} parent=1 // loop_exit
      _
    %535 = vsyncpa [#allocation3], 1
    %s536 = scalar_lea.sflag [#allocation3], 1
    %537 = vsyncpa %s536, 1
    %538 = vsyncpa [#allocation6], 1
    %539 = vsyncpa [#allocation4], 1
    %s540 = scalar_lea.sflag [#allocation4], 1
    %541 = vsyncpa %s540, 1

</llo_original>
